<compile_context>
chip_gen: v7x
topology: tpu7x:2x2x1
jax: 0.10.0
libtpu: 0.0.40
codegen_flags: <defaults>
</compile_context>

<pallas_src>
import functools
import math

import jax
import jax.numpy as jnp
from jax import lax
from jax.experimental import pallas as pl
from jax.experimental.pallas import tpu as pltpu

_NEG_INF = -1e30  # large finite negative: avoids exp(-inf - -inf) NaN traps


# ----------------------------- kernel helpers ------------------------------

def _layernorm(h, gamma, eps=1e-5):
    mu = jnp.mean(h, axis=-1, keepdims=True)
    xc = h - mu
    var = jnp.mean(xc * xc, axis=-1, keepdims=True)
    return xc * lax.rsqrt(var + eps) * gamma


def _gelu_tanh(h):
    c = 0.7978845608028654  # sqrt(2/pi)
    return 0.5 * h * (1.0 + jnp.tanh(c * (h + 0.044715 * h * h * h)))


# ------------------------- kernel 1: LN1 + K|V proj ------------------------

def _kv_proj_kernel(x_ref, g1_ref, wkv_ref, kv_ref, *, compute_dtype):
    h = _layernorm(x_ref[...], g1_ref[...])                     # f32 (bs, D)
    kv_ref[...] = jnp.dot(h.astype(compute_dtype), wkv_ref[...],
                          preferred_element_type=jnp.float32
                          ).astype(kv_ref.dtype)                # bf16 (bs, 2D)


# ------------------- kernel 2: attention + residual + FFN ------------------

def _attn_ffn_kernel(x_ref, g1_ref, wq_ref, kv_ref, wo_ref, g2_ref,
                     w1_ref, w2_ref, o_ref, x1_ref, h2_ref, acc_ref, *,
                     n_heads, block_q, block_k, compute_dtype):
    qi = pl.program_id(1)
    fi = pl.program_id(2)
    cd = compute_dtype
    D = x_ref.shape[-1]
    hd = D // n_heads
    scale = 1.0 / math.sqrt(hd)

    # -------- attention + residual 1: once per (batch, q-tile), at fi == 0 --
    @pl.when(fi == 0)
    def _attention():
        x_q = x_ref[...]                                        # (bq, D) f32
        hq = _layernorm(x_q, g1_ref[...])
        # Full-width 2-D Q projection (fills MXU N dim), scale folded in.
        q2d = jnp.dot(hq.astype(cd), wq_ref[...],
                      preferred_element_type=jnp.float32) * scale
        q2d = q2d.astype(cd)
        q_heads = [q2d[:, h * hd:(h + 1) * hd] for h in range(n_heads)]

        q_pos = qi * block_q + lax.broadcasted_iota(
            jnp.int32, (block_q, block_k), 0)
        col = lax.broadcasted_iota(jnp.int32, (block_q, block_k), 1)

        def make_step(masked):
            def step(j, carry):
                start = pl.multiple_of(j * block_k, block_k)
                kv_t = kv_ref[pl.ds(start, block_k), :]         # (bk, 2D) bf16
                if masked:
                    mask = (j * block_k + col) <= q_pos         # diagonal tile
                new_carry = []
                for h in range(n_heads):
                    m_i, l_i, acc = carry[h]
                    k_h = kv_t[:, h * hd:(h + 1) * hd]
                    v_h = kv_t[:, D + h * hd:D + (h + 1) * hd]
                    s = lax.dot_general(                         # (bq, bk) f32
                        q_heads[h], k_h, (((1,), (1,)), ((), ())),
                        preferred_element_type=jnp.float32)
                    if masked:
                        s = jnp.where(mask, s, _NEG_INF)
                    m_new = jnp.maximum(m_i, jnp.max(s, axis=-1, keepdims=True))
                    alpha = jnp.exp(m_i - m_new)
                    p = jnp.exp(s - m_new)
                    l_new = alpha * l_i + jnp.sum(p, axis=-1, keepdims=True)
                    a_new = alpha * acc + jnp.dot(
                        p.astype(cd), v_h, preferred_element_type=jnp.float32)
                    new_carry.append((m_new, l_new, a_new))
                return tuple(new_carry)
            return step

        carry0 = tuple(
            (jnp.full((block_q, 1), _NEG_INF, jnp.float32),
             jnp.zeros((block_q, 1), jnp.float32),
             jnp.zeros((block_q, hd), jnp.float32))
            for _ in range(n_heads))

        # Causal tile skipping: interior (fully visible) tiles run unmasked,
        # only the diagonal tiles pay for iota/compare/select.
        num_full = (qi * block_q) // block_k
        kv_steps = ((qi + 1) * block_q + block_k - 1) // block_k
        carry = lax.fori_loop(0, num_full, make_step(False), carry0)
        carry = lax.fori_loop(num_full, kv_steps, make_step(True), carry)

        # Normalize + output projection accumulated straight into the (bq, D)
        # residual: sum_h attn_h @ Wo_h  ==  concat(heads) @ Wo.
        x1 = x_q
        for h in range(n_heads):
            _, l_h, a_h = carry[h]
            inv = pl.reciprocal(l_h, approx=True)
            inv = inv * (2.0 - l_h * inv)            # one Newton step (cheap)
            attn_h = (a_h * inv).astype(cd)
            x1 = x1 + jnp.dot(attn_h, wo_ref[h],
                              preferred_element_type=jnp.float32)

        x1_ref[...] = x1
        h2_ref[...] = _layernorm(x1, g2_ref[...]).astype(cd)
        acc_ref[...] = jnp.zeros_like(acc_ref)

    # -------- FFN: one streamed Dff tile per grid step -----------------------
    f = jnp.dot(h2_ref[...], w1_ref[...], preferred_element_type=jnp.float32)
    f = _gelu_tanh(f)
    acc_ref[...] += jnp.dot(f.astype(cd), w2_ref[...],
                            preferred_element_type=jnp.float32)

    @pl.when(fi == pl.num_programs(2) - 1)
    def _finalize():
        o_ref[...] = (x1_ref[...] + acc_ref[...]).astype(o_ref.dtype)


# ------------------------------ host wrapper -------------------------------

def _const_spec(shape, index_map, single_buffer):
    if single_buffer:
        # Constant-index operands never change block; single-buffering halves
        # their VMEM footprint (biggest win inside v7x's 64 MiB budget).
        return pl.BlockSpec(shape, index_map, pipeline_mode=pl.Buffered(1))
    return pl.BlockSpec(shape, index_map)


def _transformer_block(x, params, n_heads, *, block_q, block_k, block_ff,
                       block_s, compute_dtype, vmem_limit_bytes,
                       single_buffer_consts):
    B, S, D = x.shape
    Dff = params["w1"].shape[1]
    assert D % n_heads == 0, "d_model must be divisible by n_heads"
    hd = D // n_heads
    cd = compute_dtype

    # Defaults per review: block_k=256 matches v6e/v7x MXU width (use 128 on
    # v5e); block_ff toward 1024. Re-derive VMEM budget per generation.
    block_q = min(block_q or 256, S)
    block_k = min(block_k or 256, S)
    block_ff = min(block_ff or 1024, Dff)
    block_s = min(block_s or 256, S)
    assert S % block_q == 0 and S % block_k == 0 and S % block_s == 0
    assert Dff % block_ff == 0
    num_q = S // block_q
    num_ff = Dff // block_ff
    num_s = S // block_s

    # Host-side layouts, cast to bf16 (MXU bf16 peak, half the DMA bytes).
    wq = params["wq"].astype(cd)                                     # (D, D)
    wkv = jnp.concatenate([params["wk"], params["wv"]], axis=1).astype(cd)
    wo = params["wo"].reshape(n_heads, hd, D).astype(cd)             # (H,hd,D)
    w1 = params["w1"].astype(cd)                                     # (D, Dff)
    w2 = params["w2"].astype(cd)                                     # (Dff, D)
    g1 = params["ln1_g"].astype(jnp.float32).reshape(1, D)
    g2 = params["ln2_g"].astype(jnp.float32).reshape(1, D)

    cparams2 = pltpu.CompilerParams(
        dimension_semantics=("parallel", "parallel"),
        vmem_limit_bytes=vmem_limit_bytes)
    cparams3 = pltpu.CompilerParams(
        dimension_semantics=("parallel", "parallel", "arbitrary"),
        vmem_limit_bytes=vmem_limit_bytes)

    # ---- pass 1: LN1 + fused K|V projection once per row, bf16 to HBM ------
    kv = pl.pallas_call(
        functools.partial(_kv_proj_kernel, compute_dtype=cd),
        out_shape=jax.ShapeDtypeStruct((B, S, 2 * D), cd),
        grid=(B, num_s),
        in_specs=[
            pl.BlockSpec((pl.Squeezed(), block_s, D), lambda b, s: (b, s, 0)),
            _const_spec((1, D), lambda b, s: (0, 0), single_buffer_consts),
            _const_spec((D, 2 * D), lambda b, s: (0, 0), single_buffer_consts),
        ],
        out_specs=pl.BlockSpec((pl.Squeezed(), block_s, 2 * D),
                               lambda b, s: (b, s, 0)),
        compiler_params=cparams2,
    )(x, g1, wkv)

    # ---- pass 2: attention + residual + streamed FFN + residual ------------
    kern = functools.partial(_attn_ffn_kernel, n_heads=n_heads,
                             block_q=block_q, block_k=block_k, compute_dtype=cd)
    sb = single_buffer_consts
    return pl.pallas_call(
        kern,
        out_shape=jax.ShapeDtypeStruct((B, S, D), x.dtype),
        grid=(B, num_q, num_ff),
        in_specs=[
            pl.BlockSpec((pl.Squeezed(), block_q, D),
                         lambda b, q, f: (b, q, 0)),                 # x q-tile
            _const_spec((1, D), lambda b, q, f: (0, 0), sb),          # ln1 gamma
            _const_spec((D, D), lambda b, q, f: (0, 0), sb),          # Wq
            _const_spec((pl.Squeezed(), S, 2 * D),
                        lambda b, q, f: (b, 0, 0), sb),               # bf16 K|V
            _const_spec((n_heads, hd, D), lambda b, q, f: (0, 0, 0), sb),  # Wo
            _const_spec((1, D), lambda b, q, f: (0, 0), sb),          # ln2 gamma
            pl.BlockSpec((D, block_ff), lambda b, q, f: (0, f)),      # W1 tile
            pl.BlockSpec((block_ff, D), lambda b, q, f: (f, 0)),      # W2 tile
        ],
        out_specs=pl.BlockSpec((pl.Squeezed(), block_q, D),
                               lambda b, q, f: (b, q, 0)),
        scratch_shapes=[
            pltpu.VMEM((block_q, D), jnp.float32),   # x1 (post-attn residual)
            pltpu.VMEM((block_q, D), cd),            # h2 = LN2(x1)
            pltpu.VMEM((block_q, D), jnp.float32),   # FFN f32 accumulator
        ],
        compiler_params=cparams3,
    )(x, g1, wq, kv, wo, g2, w1, w2)


def transformer_block(x, params, n_heads, *, block_q=None, block_k=None,
                      block_ff=None, block_s=None,
                      compute_dtype=jnp.bfloat16,
                      vmem_limit_bytes=40 * 1024 * 1024):
    """x -> x + MHA(LN1(x)) -> (+) FFN(LN2(.)), causal, bias-free."""
    kw = dict(block_q=block_q, block_k=block_k, block_ff=block_ff,
              block_s=block_s, compute_dtype=compute_dtype,
              vmem_limit_bytes=vmem_limit_bytes)
    try:
        return _transformer_block(x, params, n_heads,
                                  single_buffer_consts=True, **kw)
    except Exception:
        # pl.Buffered / pipeline_mode unavailable or rejected on this JAX
        # version: retry with default (double-buffered) constant operands.
        return _transformer_block(x, params, n_heads,
                                  single_buffer_consts=False, **kw)


# --------------------------- pure-JAX reference ----------------------------

def transformer_block_ref(x, params, n_heads):
    B, S, D = x.shape
    hd = D // n_heads

    def ln(h, g):
        mu = jnp.mean(h, -1, keepdims=True)
        var = jnp.mean((h - mu) ** 2, -1, keepdims=True)
        return (h - mu) / jnp.sqrt(var + 1e-5) * g

    h = ln(x, params["ln1_g"])
    q = h @ params["wq"]; k = h @ params["wk"]; v = h @ params["wv"]
    q = q.reshape(B, S, n_heads, hd).transpose(0, 2, 1, 3)
    k = k.reshape(B, S, n_heads, hd).transpose(0, 2, 1, 3)
    v = v.reshape(B, S, n_heads, hd).transpose(0, 2, 1, 3)
    s = jnp.einsum("bhqd,bhkd->bhqk", q, k) / jnp.sqrt(hd)
    mask = jnp.tril(jnp.ones((S, S), bool))
    s = jnp.where(mask, s, -jnp.inf)
    p = jax.nn.softmax(s, axis=-1)
    a = jnp.einsum("bhqk,bhkd->bhqd", p, v).transpose(0, 2, 1, 3).reshape(B, S, D)
    x1 = x + a @ params["wo"]
    h2 = ln(x1, params["ln2_g"])
    f = jax.nn.gelu(h2 @ params["w1"], approximate=True) @ params["w2"]
    return x1 + f


# ----------------------------------- main ----------------------------------

if __name__ == "__main__":
    B, S, D, H = 2, 16, 64, 4
    Dff = 4 * D

    key = jax.random.PRNGKey(0)
    ks = jax.random.split(key, 7)
    init = lambda k, shape: (0.02 * jax.random.normal(k, shape)).astype(jnp.float32)

    params = {
        "ln1_g": jnp.ones((D,), jnp.float32),
        "ln2_g": jnp.ones((D,), jnp.float32),
        "wq": init(ks[0], (D, D)),
        "wk": init(ks[1], (D, D)),
        "wv": init(ks[2], (D, D)),
        "wo": init(ks[3], (D, D)),
        "w1": init(ks[4], (D, Dff)),
        "w2": init(ks[5], (Dff, D)),
    }
    x = jax.random.normal(ks[6], (B, S, D), jnp.float32)

    # Small tiles so the KV pre-pass, flash KV loops (unmasked + diagonal),
    # causal tile skipping and streamed FFN tiles are all exercised:
    # prepass grid (2, 2), main grid (2, 2, 2).
    out = transformer_block(x, params, n_heads=H,
                            block_q=8, block_k=8, block_ff=128, block_s=8)
    out = jax.block_until_ready(out)

    ref = transformer_block_ref(x, params, n_heads=H)
    assert out.shape == (B, S, D)
    # bf16 weights / KV (f32 accumulation) -> compare with relaxed tolerance.
    max_err = float(jnp.max(jnp.abs(out - ref)))
    assert max_err < 2e-2, f"mismatch vs reference (max abs err = {max_err})"

    print("KERNEL_OK")
</pallas_src>

<mosaic_0001>
module attributes {stable_mosaic.version = 11 : i64} {
  func.func @_kv_proj_kernel(%arg0: i32, %arg1: i32, %arg2: memref<1x8x64xf32, #tpu.memory_space<vmem>>, %arg3: memref<1x64xf32, #tpu.memory_space<vmem>>, %arg4: memref<64x128xbf16, #tpu.memory_space<vmem>>, %arg5: memref<1x8x128xbf16, #tpu.memory_space<vmem>>) attributes {dimension_semantics = [#tpu.dimension_semantics<parallel>, #tpu.dimension_semantics<parallel>], iteration_bounds = array<i64: 2, 2>, scalar_prefetch = 0 : i64, scratch_operands = 0 : i64, tpu.core_type = #tpu.core_type<tc>, window_params = [{transform_indices = @transform_0, window_bounds = array<i64: 1, 8, 64>}, {pipeline_mode = #tpu.pipeline_mode<synchronous>, transform_indices = @transform_1, window_bounds = array<i64: 1, 64>}, {pipeline_mode = #tpu.pipeline_mode<synchronous>, transform_indices = @transform_2, window_bounds = array<i64: 64, 128>}, {transform_indices = @transform_3, window_bounds = array<i64: 1, 8, 128>}]} {
    %c0 = arith.constant 0 : index
    %c0_0 = arith.constant 0 : index
    %c0_1 = arith.constant 0 : index
    %0 = vector.load %arg2[%c0, %c0_0, %c0_1] : memref<1x8x64xf32, #tpu.memory_space<vmem>>, vector<1x8x64xf32>
    %1 = vector.shape_cast %0 : vector<1x8x64xf32> to vector<8x64xf32>
    %c0_2 = arith.constant 0 : index
    %c0_3 = arith.constant 0 : index
    %2 = vector.load %arg3[%c0_2, %c0_3] : memref<1x64xf32, #tpu.memory_space<vmem>>, vector<1x64xf32>
    %cst = arith.constant dense<0.000000e+00> : vector<8xf32>
    %3 = vector.multi_reduction <add>, %1, %cst [1] : vector<8x64xf32> to vector<8xf32>
    %4 = vector.shape_cast %3 : vector<8xf32> to vector<8x1xf32>
    %cst_4 = arith.constant 6.400000e+01 : f32
    %5 = vector.broadcast %cst_4 : f32 to vector<8x1xf32>
    %6 = arith.divf %4, %5 : vector<8x1xf32>
    %7 = vector.broadcast %6 : vector<8x1xf32> to vector<8x64xf32>
    %8 = arith.subf %1, %7 : vector<8x64xf32>
    %9 = arith.mulf %8, %8 : vector<8x64xf32>
    %cst_5 = arith.constant dense<0.000000e+00> : vector<8xf32>
    %10 = vector.multi_reduction <add>, %9, %cst_5 [1] : vector<8x64xf32> to vector<8xf32>
    %11 = vector.shape_cast %10 : vector<8xf32> to vector<8x1xf32>
    %cst_6 = arith.constant 6.400000e+01 : f32
    %12 = vector.broadcast %cst_6 : f32 to vector<8x1xf32>
    %13 = arith.divf %11, %12 : vector<8x1xf32>
    %cst_7 = arith.constant 9.99999974E-6 : f32
    %14 = vector.broadcast %cst_7 : f32 to vector<8x1xf32>
    %15 = arith.addf %13, %14 : vector<8x1xf32>
    %16 = math.rsqrt %15 : vector<8x1xf32>
    %17 = vector.broadcast %16 : vector<8x1xf32> to vector<8x64xf32>
    %18 = arith.mulf %8, %17 : vector<8x64xf32>
    %19 = vector.broadcast %2 : vector<1x64xf32> to vector<8x64xf32>
    %20 = arith.mulf %18, %19 : vector<8x64xf32>
    %21 = arith.truncf %20 : vector<8x64xf32> to vector<8x64xbf16>
    %c0_8 = arith.constant 0 : index
    %c0_9 = arith.constant 0 : index
    %22 = vector.load %arg4[%c0_8, %c0_9] : memref<64x128xbf16, #tpu.memory_space<vmem>>, vector<64x128xbf16>
    %cst_10 = arith.constant dense<0.000000e+00> : vector<8x128xf32>
    %23 = tpu.matmul %21, %22, %cst_10 {dimension_numbers = #tpu.dot_dimension_numbers<[1], [0], [0], [1], [0, 0, 1, 1], [], []>} : vector<8x64xbf16>, vector<64x128xbf16>, vector<8x128xf32> -> vector<8x128xf32>
    %24 = arith.truncf %23 : vector<8x128xf32> to vector<8x128xbf16>
    %c0_11 = arith.constant 0 : index
    %c0_12 = arith.constant 0 : index
    %c0_13 = arith.constant 0 : index
    %25 = vector.load %arg5[%c0_11, %c0_12, %c0_13] : memref<1x8x128xbf16, #tpu.memory_space<vmem>>, vector<1x8x128xbf16>
    %26 = vector.shape_cast %25 : vector<1x8x128xbf16> to vector<8x128xbf16>
    %27 = vector.shape_cast %24 : vector<8x128xbf16> to vector<1x8x128xbf16>
    tpu.vector_store %arg5[%c0_11, %c0_12, %c0_13], %27 {strides = array<i32>} : memref<1x8x128xbf16, #tpu.memory_space<vmem>>, vector<1x8x128xbf16>,
    return
  }
  func.func @transform_0(%arg0: i32, %arg1: i32) -> (i32, i32, i32) {
    %c0_i32 = arith.constant 0 : i32
    %c0_i32_0 = arith.constant 0 : i32
    return %arg0, %arg1, %c0_i32 : i32, i32, i32
  }
  func.func @transform_1(%arg0: i32, %arg1: i32) -> (i32, i32) {
    %c0_i32 = arith.constant 0 : i32
    %c0_i32_0 = arith.constant 0 : i32
    %c0_i32_1 = arith.constant 0 : i32
    return %c0_i32, %c0_i32_0 : i32, i32
  }
  func.func @transform_2(%arg0: i32, %arg1: i32) -> (i32, i32) {
    %c0_i32 = arith.constant 0 : i32
    %c0_i32_0 = arith.constant 0 : i32
    %c0_i32_1 = arith.constant 0 : i32
    return %c0_i32, %c0_i32_0 : i32, i32
  }
  func.func @transform_3(%arg0: i32, %arg1: i32) -> (i32, i32, i32) {
    %c0_i32 = arith.constant 0 : i32
    %c0_i32_0 = arith.constant 0 : i32
    return %arg0, %arg1, %c0_i32 : i32, i32, i32
  }
}

module attributes {stable_mosaic.version = 11 : i64} {
  func.func @_kv_proj_kernel(%arg0: i32, %arg1: i32, %arg2: memref<1x8x64xf32, #tpu.memory_space<vmem>>, %arg3: memref<1x64xf32, #tpu.memory_space<vmem>>, %arg4: memref<64x128xbf16, #tpu.memory_space<vmem>>, %arg5: memref<1x8x128xbf16, #tpu.memory_space<vmem>>) attributes {dimension_semantics = [#tpu.dimension_semantics<parallel>, #tpu.dimension_semantics<parallel>], iteration_bounds = array<i64: 2, 2>, scalar_prefetch = 0 : i64, scratch_operands = 0 : i64, tpu.core_type = #tpu.core_type<tc>, window_params = [{transform_indices = @transform_0, window_bounds = array<i64: 1, 8, 64>}, {pipeline_mode = #tpu.pipeline_mode<synchronous>, transform_indices = @transform_1, window_bounds = array<i64: 1, 64>}, {pipeline_mode = #tpu.pipeline_mode<synchronous>, transform_indices = @transform_2, window_bounds = array<i64: 64, 128>}, {transform_indices = @transform_3, window_bounds = array<i64: 1, 8, 128>}]} {
    %c0 = arith.constant 0 : index
    %c0_0 = arith.constant 0 : index
    %c0_1 = arith.constant 0 : index
    %0 = vector.load %arg2[%c0, %c0_0, %c0_1] : memref<1x8x64xf32, #tpu.memory_space<vmem>>, vector<1x8x64xf32>
    %1 = vector.shape_cast %0 : vector<1x8x64xf32> to vector<8x64xf32>
    %c0_2 = arith.constant 0 : index
    %c0_3 = arith.constant 0 : index
    %2 = vector.load %arg3[%c0_2, %c0_3] : memref<1x64xf32, #tpu.memory_space<vmem>>, vector<1x64xf32>
    %cst = arith.constant dense<0.000000e+00> : vector<8xf32>
    %3 = vector.multi_reduction <add>, %1, %cst [1] : vector<8x64xf32> to vector<8xf32>
    %4 = vector.shape_cast %3 : vector<8xf32> to vector<8x1xf32>
    %cst_4 = arith.constant 6.400000e+01 : f32
    %5 = vector.broadcast %cst_4 : f32 to vector<8x1xf32>
    %6 = arith.divf %4, %5 : vector<8x1xf32>
    %7 = vector.broadcast %6 : vector<8x1xf32> to vector<8x64xf32>
    %8 = arith.subf %1, %7 : vector<8x64xf32>
    %9 = arith.mulf %8, %8 : vector<8x64xf32>
    %cst_5 = arith.constant dense<0.000000e+00> : vector<8xf32>
    %10 = vector.multi_reduction <add>, %9, %cst_5 [1] : vector<8x64xf32> to vector<8xf32>
    %11 = vector.shape_cast %10 : vector<8xf32> to vector<8x1xf32>
    %cst_6 = arith.constant 6.400000e+01 : f32
    %12 = vector.broadcast %cst_6 : f32 to vector<8x1xf32>
    %13 = arith.divf %11, %12 : vector<8x1xf32>
    %cst_7 = arith.constant 9.99999974E-6 : f32
    %14 = vector.broadcast %cst_7 : f32 to vector<8x1xf32>
    %15 = arith.addf %13, %14 : vector<8x1xf32>
    %16 = math.rsqrt %15 : vector<8x1xf32>
    %17 = vector.broadcast %16 : vector<8x1xf32> to vector<8x64xf32>
    %18 = arith.mulf %8, %17 : vector<8x64xf32>
    %19 = vector.broadcast %2 : vector<1x64xf32> to vector<8x64xf32>
    %20 = arith.mulf %18, %19 : vector<8x64xf32>
    %21 = arith.truncf %20 : vector<8x64xf32> to vector<8x64xbf16>
    %c0_8 = arith.constant 0 : index
    %c0_9 = arith.constant 0 : index
    %22 = vector.load %arg4[%c0_8, %c0_9] : memref<64x128xbf16, #tpu.memory_space<vmem>>, vector<64x128xbf16>
    %cst_10 = arith.constant dense<0.000000e+00> : vector<8x128xf32>
    %23 = tpu.matmul %21, %22, %cst_10 {dimension_numbers = #tpu.dot_dimension_numbers<[1], [0], [0], [1], [0, 0, 1, 1], [], []>} : vector<8x64xbf16>, vector<64x128xbf16>, vector<8x128xf32> -> vector<8x128xf32>
    %24 = arith.truncf %23 : vector<8x128xf32> to vector<8x128xbf16>
    %c0_11 = arith.constant 0 : index
    %c0_12 = arith.constant 0 : index
    %c0_13 = arith.constant 0 : index
    %25 = vector.load %arg5[%c0_11, %c0_12, %c0_13] : memref<1x8x128xbf16, #tpu.memory_space<vmem>>, vector<1x8x128xbf16>
    %26 = vector.shape_cast %25 : vector<1x8x128xbf16> to vector<8x128xbf16>
    %27 = vector.shape_cast %24 : vector<8x128xbf16> to vector<1x8x128xbf16>
    tpu.vector_store %arg5[%c0_11, %c0_12, %c0_13], %27 {strides = array<i32>} : memref<1x8x128xbf16, #tpu.memory_space<vmem>>, vector<1x8x128xbf16>,
    return
  }
  func.func @transform_0(%arg0: i32, %arg1: i32) -> (i32, i32, i32) {
    %c0_i32 = arith.constant 0 : i32
    %c0_i32_0 = arith.constant 0 : i32
    return %arg0, %arg1, %c0_i32 : i32, i32, i32
  }
  func.func @transform_1(%arg0: i32, %arg1: i32) -> (i32, i32) {
    %c0_i32 = arith.constant 0 : i32
    %c0_i32_0 = arith.constant 0 : i32
    %c0_i32_1 = arith.constant 0 : i32
    return %c0_i32, %c0_i32_0 : i32, i32
  }
  func.func @transform_2(%arg0: i32, %arg1: i32) -> (i32, i32) {
    %c0_i32 = arith.constant 0 : i32
    %c0_i32_0 = arith.constant 0 : i32
    %c0_i32_1 = arith.constant 0 : i32
    return %c0_i32, %c0_i32_0 : i32, i32
  }
  func.func @transform_3(%arg0: i32, %arg1: i32) -> (i32, i32, i32) {
    %c0_i32 = arith.constant 0 : i32
    %c0_i32_0 = arith.constant 0 : i32
    return %arg0, %arg1, %c0_i32 : i32, i32, i32
  }
}

</mosaic_0001>

<llo_original>
// kernel: tpu_custom_call.1
$region0: #{tpu_custom_call.1}
  #allocation0 [shape = 'u32[]', space=smem, size = 0x4, offset = 0x4, fixed_abs, tag = 'smem constant byte address 0x4 - core index']
  #allocation1 [shape = 'u32[144,128]{1,0:T(1,128)}', space=vmem, size = 0x12000, scoped, tag = 'internal scratch']
  %s0 = inlined_call_operand.hbm [shape: f32[2,16,64], index: 0, kind: input, shape index: {}]
  %s1 = inlined_call_operand.vmem [shape: f32[1,64], index: 1, kind: input, shape index: {}]
  %s2 = inlined_call_operand.hbm [shape: bf16[64,128], index: 2, kind: input, shape index: {}]
  %s3 = inlined_call_operand.hbm [shape: bf16[2,16,128], index: 3, kind: output, shape index: {}]
  %s4 = sld [smem:[#allocation0]]
  $region53: #{tpu_custom_call.1} parent=0
    _
  %s6 = ssub.s32 1, %s4
  %s7 = scalar_select 0, %s6, %s4
  $region1: #{tpu_custom_call.1} parent=0
    #allocation2 [shape = 'u8[8192]{0}', space=vmem, size = 0x2000, scoped, tag = 'input window, operand 0']
    #allocation3 [shape = 's32[2]{0}', space=sflag, size = 0x8, scoped, tag = 'scoped memory for tpu_custom_call.1']
    #allocation4 [shape = 's32[2]{0}', space=sflag, size = 0x8, scoped, tag = 'scoped memory for tpu_custom_call.1']
    #allocation5 [shape = 'u8[16384]{0}', space=vmem, size = 0x4000, scoped, tag = 'input window, operand 2, single buffered']
    #allocation6 [shape = 's32[1]{0}', space=sflag, size = 0x4, scoped, tag = 'scoped memory for tpu_custom_call.1']
    #allocation7 [shape = 'u8[4096]{0}', space=vmem, size = 0x1000, scoped, tag = 'output window, operand 0']
    %8 = vsyncpa [#allocation3], 0
    %s9 = scalar_lea.sflag [#allocation3], 1
    %10 = vsyncpa %s9, 0
    %11 = vsyncpa [#allocation6], 0
    %12 = vsyncpa [#allocation4], 0
    %s13 = scalar_lea.sflag [#allocation4], 1
    %14 = vsyncpa %s13, 0
    loop: start=0, step=1, limit=6
    $region2: #{tpu_custom_call.1} parent=1 // loop_pre_header
      _
    $region3: #{tpu_custom_call.1} parent=1 // loop_header
      %s16 = sphi 0, %s20
      %p17 = scmp.ge.s32.totalorder %s16, 6
      %s23 = sphi 0, %s35
      %s24 = sphi 0, %s31
      %s25 = sphi 0, %s23
      %s26 = sphi 0, %s24
      %s27 = sphi 0, %s25
      %s28 = sphi 0, %s26
      %s40 = sphi 0, %s42
      %s43 = sphi 0, %s40
      %s44 = sphi 0, %s43
      %s60 = sphi 0, %s44
      %s64 = sphi 0, %s64
      %s66 = sphi 0, %s64
      %s67 = sphi 0, %s66
      %s81 = sphi 0, %s67
      %s85 = sphi 0, %s85
      %s87 = sphi 0, %s85
      %s88 = sphi 0, %s87
      %s102 = sphi 0, %s88
      %s110 = sphi 0, %s112
      %s113 = sphi 0, %s110
      %s114 = sphi 0, %s113
      %s130 = sphi 0, %s114
    $region4: #{tpu_custom_call.1} parent=1 // loop_header_branch
      %19 = sbr.rel (%p17) target = $region8
    $region5: #{tpu_custom_call.1} parent=1 // loop_body
      %s21 = ssub.s32 %s16, 1
      %s22 = ssub.s32 %s16, 2
      %s29 = sadd.s32 1, %s24
      %p30 = scmp.ge.s32.totalorder %s29, 2
      %s31 = scalar_select %p30, 0, %s29
      %s32 = sadd.s32 1, %s23
      %s33 = scalar_select %p30, %s32, %s23
      %p34 = scmp.ge.s32.totalorder %s33, 2
      %s35 = scalar_select %p34, 0, %s33
      %s36 = ssub.s32 %s23, %s35
      %s37 = ssub.s32 %s24, %s31
      %s38 = sor.u32 %s36, %s37
      %p39 = scmp.eq.s32.totalorder %s38, 0
      %s41 = sadd.s32 %s40, 1
      %s42 = scalar_select %p39, %s40, %s41
      %p45 = pneg %p39
      %p46 = scmp.eq.s32.totalorder %s16, 3
      %p47 = por %p45, %p46
      %p48 = scmp.ne.s32.totalorder %s40, %s43
      %p49 = scmp.eq.s32.totalorder %s16, 0
      %p50 = por %p48, %p49
      %p51 = scmp.ne.s32.totalorder %s40, %s43
      %p52 = scmp.eq.s32.totalorder %s21, 3
      %p53 = por %p51, %p52
      %p54 = scmp.ne.s32.totalorder %s43, %s44
      %p55 = scmp.eq.s32.totalorder %s21, 0
      %p56 = por %p54, %p55
      %p57 = scmp.ne.s32.totalorder %s43, %s44
      %p58 = scmp.eq.s32.totalorder %s22, 3
      %p59 = por %p57, %p58
      %p61 = scmp.ne.s32.totalorder %s44, %s60
      %p62 = scmp.eq.s32.totalorder %s22, 0
      %p63 = por %p61, %p62
      %s65 = sadd.s32 %s64, 1
      %p68 = scmp.eq.s32.totalorder %s16, 3
      %p69 = scmp.ne.s32.totalorder %s64, %s66
      %p70 = scmp.eq.s32.totalorder %s16, 0
      %p71 = por %p69, %p70
      %p72 = scmp.ne.s32.totalorder %s64, %s66
      %p73 = scmp.eq.s32.totalorder %s21, 3
      %p74 = por %p72, %p73
      %p75 = scmp.ne.s32.totalorder %s66, %s67
      %p76 = scmp.eq.s32.totalorder %s21, 0
      %p77 = por %p75, %p76
      %p78 = scmp.ne.s32.totalorder %s66, %s67
      %p79 = scmp.eq.s32.totalorder %s22, 3
      %p80 = por %p78, %p79
      %p82 = scmp.ne.s32.totalorder %s67, %s81
      %p83 = scmp.eq.s32.totalorder %s22, 0
      %p84 = por %p82, %p83
      %s86 = sadd.s32 %s85, 1
      %p89 = scmp.eq.s32.totalorder %s16, 3
      %p90 = scmp.ne.s32.totalorder %s85, %s87
      %p91 = scmp.eq.s32.totalorder %s16, 0
      %p92 = por %p90, %p91
      %p93 = scmp.ne.s32.totalorder %s85, %s87
      %p94 = scmp.eq.s32.totalorder %s21, 3
      %p95 = por %p93, %p94
      %p96 = scmp.ne.s32.totalorder %s87, %s88
      %p97 = scmp.eq.s32.totalorder %s21, 0
      %p98 = por %p96, %p97
      %p99 = scmp.ne.s32.totalorder %s87, %s88
      %p100 = scmp.eq.s32.totalorder %s22, 3
      %p101 = por %p99, %p100
      %p103 = scmp.ne.s32.totalorder %s88, %s102
      %p104 = scmp.eq.s32.totalorder %s22, 0
      %p105 = por %p103, %p104
      %s106 = ssub.s32 %s23, %s35
      %s107 = ssub.s32 %s24, %s31
      %s108 = sor.u32 %s106, %s107
      %p109 = scmp.eq.s32.totalorder %s108, 0
      %s111 = sadd.s32 %s110, 1
      %s112 = scalar_select %p109, %s110, %s111
      %p115 = pneg %p109
      %p116 = scmp.eq.s32.totalorder %s16, 3
      %p117 = por %p115, %p116
      %p118 = scmp.ne.s32.totalorder %s110, %s113
      %p119 = scmp.eq.s32.totalorder %s16, 0
      %p120 = por %p118, %p119
      %p121 = scmp.ne.s32.totalorder %s110, %s113
      %p122 = scmp.eq.s32.totalorder %s21, 3
      %p123 = por %p121, %p122
      %p124 = scmp.ne.s32.totalorder %s113, %s114
      %p125 = scmp.eq.s32.totalorder %s21, 0
      %p126 = por %p124, %p125
      %p127 = scmp.ne.s32.totalorder %s113, %s114
      %p128 = scmp.eq.s32.totalorder %s22, 3
      %p129 = por %p127, %p128
      %p131 = scmp.ne.s32.totalorder %s114, %s130
      %p132 = scmp.eq.s32.totalorder %s22, 0
      %p133 = por %p131, %p132
      %p134 = scmp.le.s32.totalorder 1, %s16
      %p135 = scmp.lt.s32.totalorder %s16, 5
      %p136 = pnand %p134, %p135
      %p137 = pneg %p136
      // Predicated region
      $region9: #{tpu_custom_call.1} parent=5 // pred_check
        _
      $region10: #{tpu_custom_call.1} parent=5 // pred_check_branch
        %139 = sbr.rel (%p136) target = $region12
      $region11: #{tpu_custom_call.1} parent=5 // pred_region
        %s140 = ssub.s32 %s16, 1
        // Predicated region
        $region13: #{tpu_custom_call.1} parent=11 // pred_check
          %p141 = pneg %p77
        $region14: #{tpu_custom_call.1} parent=11 // pred_check_branch
          %143 = sbr.rel (%p141) target = $region16
        $region15: #{tpu_custom_call.1} parent=11 // pred_region
          _
        $region16: #{tpu_custom_call.1} parent=11 // pred_fallthru
          _
        // Predicated region
        $region17: #{tpu_custom_call.1} parent=11 // pred_check
          %p144 = pneg %p98
        $region18: #{tpu_custom_call.1} parent=11 // pred_check_branch
          %146 = sbr.rel (%p144) target = $region20
        $region19: #{tpu_custom_call.1} parent=11 // pred_region
          %s148 = ssub.s32 512, 512
          %149 = vsyncadd [#allocation6], %s148
          %s150 = sshll.u32 [#allocation5], 4
          %s151 = int_to_ptr.vmem [resolvable:$true] %s150
          %156 = dma.hbm_to_vmem [thread:$0]  %s2, 512, %s151, [#allocation6], 64, 64, 4
        $region20: #{tpu_custom_call.1} parent=11 // pred_fallthru
          _
      $region12: #{tpu_custom_call.1} parent=5 // pred_fallthru
        _
      %p157 = scmp.lt.s32.totalorder %s16, 4
      // Predicated region
      $region21: #{tpu_custom_call.1} parent=5 // pred_check
        %p158 = pneg %p157
      $region22: #{tpu_custom_call.1} parent=5 // pred_check_branch
        %160 = sbr.rel (%p158) target = $region24
      $region23: #{tpu_custom_call.1} parent=5 // pred_region
        // Predicated region
        $region25: #{tpu_custom_call.1} parent=23 // pred_check
          %p161 = pneg %p50
        $region26: #{tpu_custom_call.1} parent=23 // pred_check_branch
          %163 = sbr.rel (%p161) target = $region28
        $region27: #{tpu_custom_call.1} parent=23 // pred_region
          %s164 = sand.u32 %s40, 1
          %s165 = scalar_lea.sflag [#allocation3], %s164
          %s166 = sand.u32 %s40, 1
          %s167 = smul.addr %s166, 8
          %s168 = scalar_lea.vmem [#allocation2], %s167
          %s170 = ssub.s32 128, 128
          %171 = vsyncadd %s165, %s170
          %s172 = smul.addr %s23, 2
          %s173 = sadd.s32 %s24, %s172
          %s174 = smul.addr %s173, 128
          %s175 = scalar_lea.hbm %s0, %s174
          %s177 = sshll.u32 %s168, 4
          %s178 = int_to_ptr.vmem [resolvable:$true] %s177
          %180 = dma.hbm_to_vmem [thread:$0]  %s175, 128, %s178, %s165
        $region28: #{tpu_custom_call.1} parent=23 // pred_fallthru
          _
      $region24: #{tpu_custom_call.1} parent=5 // pred_fallthru
        _
      %p181 = scmp.le.s32.totalorder 1, %s16
      %p182 = scmp.lt.s32.totalorder %s16, 5
      %p183 = pnand %p181, %p182
      %p184 = pneg %p183
      // Predicated region
      $region29: #{tpu_custom_call.1} parent=5 // pred_check
        _
      $region30: #{tpu_custom_call.1} parent=5 // pred_check_branch
        %186 = sbr.rel (%p183) target = $region32
      $region31: #{tpu_custom_call.1} parent=5 // pred_region
        %s187 = ssub.s32 %s16, 1
        %s188 = sand.u32 %s43, 1
        %s189 = scalar_lea.sflag [#allocation3], %s188
        %s190 = sand.u32 %s43, 1
        %s191 = smul.addr %s190, 8
        %s192 = scalar_lea.vmem [#allocation2], %s191
        // Predicated region
        $region33: #{tpu_custom_call.1} parent=31 // pred_check
          %p193 = pneg %p56
        $region34: #{tpu_custom_call.1} parent=31 // pred_check_branch
          %195 = sbr.rel (%p193) target = $region36
        $region35: #{tpu_custom_call.1} parent=31 // pred_region
          %196 = dma.done %s189, 128
        $region36: #{tpu_custom_call.1} parent=31 // pred_fallthru
          _
        // Predicated region
        $region37: #{tpu_custom_call.1} parent=31 // pred_check
          %p197 = pneg %p98
        $region38: #{tpu_custom_call.1} parent=31 // pred_check_branch
          %199 = sbr.rel (%p197) target = $region40
        $region39: #{tpu_custom_call.1} parent=31 // pred_region
          %200 = dma.done [#allocation6], 512
        $region40: #{tpu_custom_call.1} parent=31 // pred_fallthru
          _
        %s201 = sand.u32 %s43, 1
        %s202 = scalar_lea.sflag [#allocation3], %s201
        %s203 = sand.u32 %s43, 1
        %s204 = smul.addr %s203, 8
        %s205 = scalar_lea.vmem [#allocation2], %s204
        %p206 = pneg %p56
        %p207 = pneg %p53
        %p208 = pneg %p77
        %p209 = pneg %p74
        %p210 = pneg %p98
        %p211 = pneg %p95
        %p212 = pneg %p126
        %p213 = pneg %p123
        %s214 = sand.u32 %s113, 1
        %s215 = scalar_lea.sflag [#allocation4], %s214
        %s216 = sand.u32 %s113, 1
        %s217 = smul.addr %s216, 4
        %s218 = scalar_lea.vmem [#allocation7], %s217
        %v220 = vld [vmem:[%s192] sm:$0xff]
        %v221 = vld [vmem:[%s1] sm:$0x1]
        %vm222 = vcmask 523264
        %v223 = vsel %vm222, %v220, 0.0
        %224 = vadd.xlane.f32.xlu0 %v223
        %v225 = vpop.xlane.xlu0 %224
        %v226 = vrcp.pop 64.0
        %v227 = vmul.f32 %v225, %v226
        %v228 = vsub.f32 %v220, %v227
        %v229 = vmul.f32 %v228, %v228
        %v230 = vsel %vm222, %v229, 0.0
        %231 = vadd.xlane.f32.xlu0 %v230
        %v232 = vpop.xlane.xlu0 %231
        %v233 = vmul.f32 %v232, %v226
        %v234 = vadd.f32 %v233, 1e-05
        %v235 = vrsqrt.pop %v234
        %v236 = vmul.f32 %v228, %v235
        %v238 = vlaneseq
        %v239 = vshrl.u32 %v238, 7
        %v240 = vsub.s32 0, %v239
        %v241 = vrot.slane %v221, %v240
        %v243 = vmul.f32 %v236, %v241
        %v244 = vpack.c.bf16 %v243, %v243
        %v245 = vld [vmem:[#allocation5] sm:$0xf]
        %v246 = vld [vmem:[#allocation5 + $0x4] sm:$0xf]
        %v247 = vld [vmem:[#allocation5 + $0x8] sm:$0xf]
        %v248 = vld [vmem:[#allocation5 + $0xc] sm:$0xf]
        %v249 = vld [vmem:[#allocation5 + $0x10] sm:$0xf]
        %v250 = vld [vmem:[#allocation5 + $0x14] sm:$0xf]
        %v251 = vld [vmem:[#allocation5 + $0x18] sm:$0xf]
        %v252 = vld [vmem:[#allocation5 + $0x1c] sm:$0xf]
        %v261 = vunpack.c.l.b16 %v245
        %v262 = vunpack.c.l.b16 %v246
        %v263 = vunpack.c.l.b16 %v247
        %v264 = vunpack.c.l.b16 %v248
        %v265 = vunpack.c.l.b16 %v249
        %v266 = vunpack.c.l.b16 %v250
        %v267 = vunpack.c.l.b16 %v251
        %v268 = vunpack.c.l.b16 %v252
        %v269 = vpack.c.b16 %v262, %v261
        %v270 = vpack.c.b16 %v264, %v263
        %v271 = vpack.c.b16 %v266, %v265
        %v272 = vpack.c.b16 %v268, %v267
        %v278 = vsel %vm222, %v244, 0
        %280 = vmatprep.subr.bf16.mxu0 0
        %281 = vmatpush1.bf16.msra.mxu0 %v269
        %282 = vmatprep.subr.bf16.mxu0 0
        %283 = vmatpush1.bf16.msra.mxu0 %v270
        %284 = vmatprep.subr.bf16.mxu0 0
        %285 = vmatpush1.bf16.msra.mxu0 %v271
        %286 = vmatprep.subr.bf16.mxu0 0
        %287 = vmatpush1.bf16.msra.mxu0 %v272
        %288 = vmatprep.subr.bf16.mxu0 0
        %289 = vmatpush1.bf16.msra.mxu0 0
        %290 = vmatprep.subr.bf16.mxu0 0
        %291 = vmatpush1.bf16.msra.mxu0 0
        %292 = vmatprep.subr.bf16.mxu0 0
        %293 = vmatpush1.bf16.msra.mxu0 0
        %294 = vmatprep.subr.bf16.mxu0 0
        %295 = vmatpush1.bf16.msra.mxu0 0
        %296 = vmatprep.subr.bf16.mxu0 0
        %297 = vmatpush1.bf16.msra.mxu0 0
        %298 = vmatprep.subr.bf16.mxu0 0
        %299 = vmatpush1.bf16.msra.mxu0 0
        %300 = vmatprep.subr.bf16.mxu0 0
        %301 = vmatpush1.bf16.msra.mxu0 0
        %302 = vmatprep.subr.bf16.mxu0 0
        %303 = vmatpush1.bf16.msra.mxu0 0
        %304 = vmatprep.subr.bf16.mxu0 0
        %305 = vmatpush1.bf16.msra.mxu0 0
        %306 = vmatprep.subr.bf16.mxu0 0
        %307 = vmatpush1.bf16.msra.mxu0 0
        %308 = vmatprep.subr.bf16.mxu0 0
        %309 = vmatpush1.bf16.msra.mxu0 0
        %310 = vmatprep.subr.bf16.mxu0 0
        %311 = vmatpush1.bf16.msra.mxu0 0
        %312 = vmatprep.mubr.bf16.mxu0 0
        %313 = vmatmul.mubr.bf16.gmra.mrb[0].mxu0 %v278
        %v314 = vpop.f32.mrb[0].mxu0
        %v315 = vadd.f32 0.0, %v314
        %v316 = vpop.f32.mrb[0].mxu0
        %v317 = vpop.f32.mrb[0].mxu0
        %v318 = vpop.f32.mrb[0].mxu0
        %319 = vdwg.mxu0
        %v320 = vpack.c.bf16 %v315, %v315
        %321 = vst [vmem:[%s218] sm:$0xf] %v320
        %s322 = sand.u32 %s113, 1
        %s323 = scalar_lea.sflag [#allocation4], %s322
        %s324 = sand.u32 %s113, 1
        %s325 = smul.addr %s324, 4
        %s326 = scalar_lea.vmem [#allocation7], %s325
        // Predicated region
        $region41: #{tpu_custom_call.1} parent=31 // pred_check
          %p327 = pneg %p123
        $region42: #{tpu_custom_call.1} parent=31 // pred_check_branch
          %329 = sbr.rel (%p327) target = $region44
        $region43: #{tpu_custom_call.1} parent=31 // pred_region
          %s331 = ssub.s32 64, 64
          %332 = vsyncadd %s323, %s331
          %s333 = smul.addr %s25, 2
          %s334 = sadd.s32 %s26, %s333
          %s335 = smul.addr %s334, 64
          %s336 = scalar_lea.hbm %s3, %s335
          %s338 = sshll.u32 %s326, 4
          %s339 = int_to_ptr.vmem [resolvable:$true] %s338
          %341 = dma.vmem_to_hbm [thread:$0]  %s339, 64, %s336, %s323
        $region44: #{tpu_custom_call.1} parent=31 // pred_fallthru
          _
      $region32: #{tpu_custom_call.1} parent=5 // pred_fallthru
        _
      %p342 = scmp.le.s32.totalorder 2, %s16
      // Predicated region
      $region45: #{tpu_custom_call.1} parent=5 // pred_check
        %p343 = pneg %p342
      $region46: #{tpu_custom_call.1} parent=5 // pred_check_branch
        %345 = sbr.rel (%p343) target = $region48
      $region47: #{tpu_custom_call.1} parent=5 // pred_region
        %s346 = ssub.s32 %s16, 2
        // Predicated region
        $region49: #{tpu_custom_call.1} parent=47 // pred_check
          %p347 = pneg %p129
        $region50: #{tpu_custom_call.1} parent=47 // pred_check_branch
          %349 = sbr.rel (%p347) target = $region52
        $region51: #{tpu_custom_call.1} parent=47 // pred_region
          %s350 = sand.u32 %s114, 1
          %s351 = scalar_lea.sflag [#allocation4], %s350
          %s352 = sand.u32 %s114, 1
          %s353 = smul.addr %s352, 4
          %s354 = scalar_lea.vmem [#allocation7], %s353
          %355 = dma.done %s351, 64
        $region52: #{tpu_custom_call.1} parent=47 // pred_fallthru
          _
      $region48: #{tpu_custom_call.1} parent=5 // pred_fallthru
        _
    $region6: #{tpu_custom_call.1} parent=1 // loop_footer
      %s20 = sadd.s32 1, %s16
    $region7: #{tpu_custom_call.1} parent=1 // loop_footer_branch
      %15 = sbr.rel target = $region3
    $region8: #{tpu_custom_call.1} parent=1 // loop_exit
      _
    %356 = vsyncpa [#allocation3], 1
    %s357 = scalar_lea.sflag [#allocation3], 1
    %358 = vsyncpa %s357, 1
    %359 = vsyncpa [#allocation6], 1
    %360 = vsyncpa [#allocation4], 1
    %s361 = scalar_lea.sflag [#allocation4], 1
    %362 = vsyncpa %s361, 1

// kernel: tpu_custom_call.1
$region0: #{tpu_custom_call.1}
  #allocation0 [shape = 'u32[]', space=smem, size = 0x4, offset = 0x4, fixed_abs, tag = 'smem constant byte address 0x4 - core index']
  #allocation1 [shape = 'u32[144,128]{1,0:T(1,128)}', space=vmem, size = 0x12000, scoped, tag = 'internal scratch']
  %s0 = inlined_call_operand.hbm [shape: f32[2,16,64], index: 0, kind: input, shape index: {}]
  %s1 = inlined_call_operand.vmem [shape: f32[1,64], index: 1, kind: input, shape index: {}]
  %s2 = inlined_call_operand.hbm [shape: bf16[64,128], index: 2, kind: input, shape index: {}]
  %s3 = inlined_call_operand.hbm [shape: bf16[2,16,128], index: 3, kind: output, shape index: {}]
  %s4 = sld [smem:[#allocation0]]
  $region53: #{tpu_custom_call.1} parent=0
    _
  %s6 = ssub.s32 1, %s4
  %s7 = scalar_select 0, %s6, %s4
  $region1: #{tpu_custom_call.1} parent=0
    #allocation2 [shape = 'u8[8192]{0}', space=vmem, size = 0x2000, scoped, tag = 'input window, operand 0']
    #allocation3 [shape = 's32[2]{0}', space=sflag, size = 0x8, scoped, tag = 'scoped memory for tpu_custom_call.1']
    #allocation4 [shape = 's32[2]{0}', space=sflag, size = 0x8, scoped, tag = 'scoped memory for tpu_custom_call.1']
    #allocation5 [shape = 'u8[16384]{0}', space=vmem, size = 0x4000, scoped, tag = 'input window, operand 2, single buffered']
    #allocation6 [shape = 's32[1]{0}', space=sflag, size = 0x4, scoped, tag = 'scoped memory for tpu_custom_call.1']
    #allocation7 [shape = 'u8[4096]{0}', space=vmem, size = 0x1000, scoped, tag = 'output window, operand 0']
    %8 = vsyncpa [#allocation3], 0
    %s9 = scalar_lea.sflag [#allocation3], 1
    %10 = vsyncpa %s9, 0
    %11 = vsyncpa [#allocation6], 0
    %12 = vsyncpa [#allocation4], 0
    %s13 = scalar_lea.sflag [#allocation4], 1
    %14 = vsyncpa %s13, 0
    loop: start=0, step=1, limit=6
    $region2: #{tpu_custom_call.1} parent=1 // loop_pre_header
      _
    $region3: #{tpu_custom_call.1} parent=1 // loop_header
      %s16 = sphi 0, %s20
      %p17 = scmp.ge.s32.totalorder %s16, 6
      %s23 = sphi 0, %s35
      %s24 = sphi 0, %s31
      %s25 = sphi 0, %s23
      %s26 = sphi 0, %s24
      %s27 = sphi 0, %s25
      %s28 = sphi 0, %s26
      %s40 = sphi 0, %s42
      %s43 = sphi 0, %s40
      %s44 = sphi 0, %s43
      %s60 = sphi 0, %s44
      %s64 = sphi 0, %s64
      %s66 = sphi 0, %s64
      %s67 = sphi 0, %s66
      %s81 = sphi 0, %s67
      %s85 = sphi 0, %s85
      %s87 = sphi 0, %s85
      %s88 = sphi 0, %s87
      %s102 = sphi 0, %s88
      %s110 = sphi 0, %s112
      %s113 = sphi 0, %s110
      %s114 = sphi 0, %s113
      %s130 = sphi 0, %s114
    $region4: #{tpu_custom_call.1} parent=1 // loop_header_branch
      %19 = sbr.rel (%p17) target = $region8
    $region5: #{tpu_custom_call.1} parent=1 // loop_body
      %s21 = ssub.s32 %s16, 1
      %s22 = ssub.s32 %s16, 2
      %s29 = sadd.s32 1, %s24
      %p30 = scmp.ge.s32.totalorder %s29, 2
      %s31 = scalar_select %p30, 0, %s29
      %s32 = sadd.s32 1, %s23
      %s33 = scalar_select %p30, %s32, %s23
      %p34 = scmp.ge.s32.totalorder %s33, 2
      %s35 = scalar_select %p34, 0, %s33
      %s36 = ssub.s32 %s23, %s35
      %s37 = ssub.s32 %s24, %s31
      %s38 = sor.u32 %s36, %s37
      %p39 = scmp.eq.s32.totalorder %s38, 0
      %s41 = sadd.s32 %s40, 1
      %s42 = scalar_select %p39, %s40, %s41
      %p45 = pneg %p39
      %p46 = scmp.eq.s32.totalorder %s16, 3
      %p47 = por %p45, %p46
      %p48 = scmp.ne.s32.totalorder %s40, %s43
      %p49 = scmp.eq.s32.totalorder %s16, 0
      %p50 = por %p48, %p49
      %p51 = scmp.ne.s32.totalorder %s40, %s43
      %p52 = scmp.eq.s32.totalorder %s21, 3
      %p53 = por %p51, %p52
      %p54 = scmp.ne.s32.totalorder %s43, %s44
      %p55 = scmp.eq.s32.totalorder %s21, 0
      %p56 = por %p54, %p55
      %p57 = scmp.ne.s32.totalorder %s43, %s44
      %p58 = scmp.eq.s32.totalorder %s22, 3
      %p59 = por %p57, %p58
      %p61 = scmp.ne.s32.totalorder %s44, %s60
      %p62 = scmp.eq.s32.totalorder %s22, 0
      %p63 = por %p61, %p62
      %s65 = sadd.s32 %s64, 1
      %p68 = scmp.eq.s32.totalorder %s16, 3
      %p69 = scmp.ne.s32.totalorder %s64, %s66
      %p70 = scmp.eq.s32.totalorder %s16, 0
      %p71 = por %p69, %p70
      %p72 = scmp.ne.s32.totalorder %s64, %s66
      %p73 = scmp.eq.s32.totalorder %s21, 3
      %p74 = por %p72, %p73
      %p75 = scmp.ne.s32.totalorder %s66, %s67
      %p76 = scmp.eq.s32.totalorder %s21, 0
      %p77 = por %p75, %p76
      %p78 = scmp.ne.s32.totalorder %s66, %s67
      %p79 = scmp.eq.s32.totalorder %s22, 3
      %p80 = por %p78, %p79
      %p82 = scmp.ne.s32.totalorder %s67, %s81
      %p83 = scmp.eq.s32.totalorder %s22, 0
      %p84 = por %p82, %p83
      %s86 = sadd.s32 %s85, 1
      %p89 = scmp.eq.s32.totalorder %s16, 3
      %p90 = scmp.ne.s32.totalorder %s85, %s87
      %p91 = scmp.eq.s32.totalorder %s16, 0
      %p92 = por %p90, %p91
      %p93 = scmp.ne.s32.totalorder %s85, %s87
      %p94 = scmp.eq.s32.totalorder %s21, 3
      %p95 = por %p93, %p94
      %p96 = scmp.ne.s32.totalorder %s87, %s88
      %p97 = scmp.eq.s32.totalorder %s21, 0
      %p98 = por %p96, %p97
      %p99 = scmp.ne.s32.totalorder %s87, %s88
      %p100 = scmp.eq.s32.totalorder %s22, 3
      %p101 = por %p99, %p100
      %p103 = scmp.ne.s32.totalorder %s88, %s102
      %p104 = scmp.eq.s32.totalorder %s22, 0
      %p105 = por %p103, %p104
      %s106 = ssub.s32 %s23, %s35
      %s107 = ssub.s32 %s24, %s31
      %s108 = sor.u32 %s106, %s107
      %p109 = scmp.eq.s32.totalorder %s108, 0
      %s111 = sadd.s32 %s110, 1
      %s112 = scalar_select %p109, %s110, %s111
      %p115 = pneg %p109
      %p116 = scmp.eq.s32.totalorder %s16, 3
      %p117 = por %p115, %p116
      %p118 = scmp.ne.s32.totalorder %s110, %s113
      %p119 = scmp.eq.s32.totalorder %s16, 0
      %p120 = por %p118, %p119
      %p121 = scmp.ne.s32.totalorder %s110, %s113
      %p122 = scmp.eq.s32.totalorder %s21, 3
      %p123 = por %p121, %p122
      %p124 = scmp.ne.s32.totalorder %s113, %s114
      %p125 = scmp.eq.s32.totalorder %s21, 0
      %p126 = por %p124, %p125
      %p127 = scmp.ne.s32.totalorder %s113, %s114
      %p128 = scmp.eq.s32.totalorder %s22, 3
      %p129 = por %p127, %p128
      %p131 = scmp.ne.s32.totalorder %s114, %s130
      %p132 = scmp.eq.s32.totalorder %s22, 0
      %p133 = por %p131, %p132
      %p134 = scmp.le.s32.totalorder 1, %s16
      %p135 = scmp.lt.s32.totalorder %s16, 5
      %p136 = pnand %p134, %p135
      %p137 = pneg %p136
      // Predicated region
      $region9: #{tpu_custom_call.1} parent=5 // pred_check
        _
      $region10: #{tpu_custom_call.1} parent=5 // pred_check_branch
        %139 = sbr.rel (%p136) target = $region12
      $region11: #{tpu_custom_call.1} parent=5 // pred_region
        %s140 = ssub.s32 %s16, 1
        // Predicated region
        $region13: #{tpu_custom_call.1} parent=11 // pred_check
          %p141 = pneg %p77
        $region14: #{tpu_custom_call.1} parent=11 // pred_check_branch
          %143 = sbr.rel (%p141) target = $region16
        $region15: #{tpu_custom_call.1} parent=11 // pred_region
          _
        $region16: #{tpu_custom_call.1} parent=11 // pred_fallthru
          _
        // Predicated region
        $region17: #{tpu_custom_call.1} parent=11 // pred_check
          %p144 = pneg %p98
        $region18: #{tpu_custom_call.1} parent=11 // pred_check_branch
          %146 = sbr.rel (%p144) target = $region20
        $region19: #{tpu_custom_call.1} parent=11 // pred_region
          %s148 = ssub.s32 512, 512
          %149 = vsyncadd [#allocation6], %s148
          %s150 = sshll.u32 [#allocation5], 4
          %s151 = int_to_ptr.vmem [resolvable:$true] %s150
          %156 = dma.hbm_to_vmem [thread:$0]  %s2, 512, %s151, [#allocation6], 64, 64, 4
        $region20: #{tpu_custom_call.1} parent=11 // pred_fallthru
          _
      $region12: #{tpu_custom_call.1} parent=5 // pred_fallthru
        _
      %p157 = scmp.lt.s32.totalorder %s16, 4
      // Predicated region
      $region21: #{tpu_custom_call.1} parent=5 // pred_check
        %p158 = pneg %p157
      $region22: #{tpu_custom_call.1} parent=5 // pred_check_branch
        %160 = sbr.rel (%p158) target = $region24
      $region23: #{tpu_custom_call.1} parent=5 // pred_region
        // Predicated region
        $region25: #{tpu_custom_call.1} parent=23 // pred_check
          %p161 = pneg %p50
        $region26: #{tpu_custom_call.1} parent=23 // pred_check_branch
          %163 = sbr.rel (%p161) target = $region28
        $region27: #{tpu_custom_call.1} parent=23 // pred_region
          %s164 = sand.u32 %s40, 1
          %s165 = scalar_lea.sflag [#allocation3], %s164
          %s166 = sand.u32 %s40, 1
          %s167 = smul.addr %s166, 8
          %s168 = scalar_lea.vmem [#allocation2], %s167
          %s170 = ssub.s32 128, 128
          %171 = vsyncadd %s165, %s170
          %s172 = smul.addr %s23, 2
          %s173 = sadd.s32 %s24, %s172
          %s174 = smul.addr %s173, 128
          %s175 = scalar_lea.hbm %s0, %s174
          %s177 = sshll.u32 %s168, 4
          %s178 = int_to_ptr.vmem [resolvable:$true] %s177
          %180 = dma.hbm_to_vmem [thread:$0]  %s175, 128, %s178, %s165
        $region28: #{tpu_custom_call.1} parent=23 // pred_fallthru
          _
      $region24: #{tpu_custom_call.1} parent=5 // pred_fallthru
        _
      %p181 = scmp.le.s32.totalorder 1, %s16
      %p182 = scmp.lt.s32.totalorder %s16, 5
      %p183 = pnand %p181, %p182
      %p184 = pneg %p183
      // Predicated region
      $region29: #{tpu_custom_call.1} parent=5 // pred_check
        _
      $region30: #{tpu_custom_call.1} parent=5 // pred_check_branch
        %186 = sbr.rel (%p183) target = $region32
      $region31: #{tpu_custom_call.1} parent=5 // pred_region
        %s187 = ssub.s32 %s16, 1
        %s188 = sand.u32 %s43, 1
        %s189 = scalar_lea.sflag [#allocation3], %s188
        %s190 = sand.u32 %s43, 1
        %s191 = smul.addr %s190, 8
        %s192 = scalar_lea.vmem [#allocation2], %s191
        // Predicated region
        $region33: #{tpu_custom_call.1} parent=31 // pred_check
          %p193 = pneg %p56
        $region34: #{tpu_custom_call.1} parent=31 // pred_check_branch
          %195 = sbr.rel (%p193) target = $region36
        $region35: #{tpu_custom_call.1} parent=31 // pred_region
          %196 = dma.done %s189, 128
        $region36: #{tpu_custom_call.1} parent=31 // pred_fallthru
          _
        // Predicated region
        $region37: #{tpu_custom_call.1} parent=31 // pred_check
          %p197 = pneg %p98
        $region38: #{tpu_custom_call.1} parent=31 // pred_check_branch
          %199 = sbr.rel (%p197) target = $region40
        $region39: #{tpu_custom_call.1} parent=31 // pred_region
          %200 = dma.done [#allocation6], 512
        $region40: #{tpu_custom_call.1} parent=31 // pred_fallthru
          _
        %s201 = sand.u32 %s43, 1
        %s202 = scalar_lea.sflag [#allocation3], %s201
        %s203 = sand.u32 %s43, 1
        %s204 = smul.addr %s203, 8
        %s205 = scalar_lea.vmem [#allocation2], %s204
        %p206 = pneg %p56
        %p207 = pneg %p53
        %p208 = pneg %p77
        %p209 = pneg %p74
        %p210 = pneg %p98
        %p211 = pneg %p95
        %p212 = pneg %p126
        %p213 = pneg %p123
        %s214 = sand.u32 %s113, 1
        %s215 = scalar_lea.sflag [#allocation4], %s214
        %s216 = sand.u32 %s113, 1
        %s217 = smul.addr %s216, 4
        %s218 = scalar_lea.vmem [#allocation7], %s217
        %v220 = vld [vmem:[%s192] sm:$0xff]
        %v221 = vld [vmem:[%s1] sm:$0x1]
        %vm222 = vcmask 523264
        %v223 = vsel %vm222, %v220, 0.0
        %224 = vadd.xlane.f32.xlu0 %v223
        %v225 = vpop.xlane.xlu0 %224
        %v226 = vrcp.pop 64.0
        %v227 = vmul.f32 %v225, %v226
        %v228 = vsub.f32 %v220, %v227
        %v229 = vmul.f32 %v228, %v228
        %v230 = vsel %vm222, %v229, 0.0
        %231 = vadd.xlane.f32.xlu0 %v230
        %v232 = vpop.xlane.xlu0 %231
        %v233 = vmul.f32 %v232, %v226
        %v234 = vadd.f32 %v233, 1e-05
        %v235 = vrsqrt.pop %v234
        %v236 = vmul.f32 %v228, %v235
        %v238 = vlaneseq
        %v239 = vshrl.u32 %v238, 7
        %v240 = vsub.s32 0, %v239
        %v241 = vrot.slane %v221, %v240
        %v243 = vmul.f32 %v236, %v241
        %v244 = vpack.c.bf16 %v243, %v243
        %v245 = vld [vmem:[#allocation5] sm:$0xf]
        %v246 = vld [vmem:[#allocation5 + $0x4] sm:$0xf]
        %v247 = vld [vmem:[#allocation5 + $0x8] sm:$0xf]
        %v248 = vld [vmem:[#allocation5 + $0xc] sm:$0xf]
        %v249 = vld [vmem:[#allocation5 + $0x10] sm:$0xf]
        %v250 = vld [vmem:[#allocation5 + $0x14] sm:$0xf]
        %v251 = vld [vmem:[#allocation5 + $0x18] sm:$0xf]
        %v252 = vld [vmem:[#allocation5 + $0x1c] sm:$0xf]
        %v261 = vunpack.c.l.b16 %v245
        %v262 = vunpack.c.l.b16 %v246
        %v263 = vunpack.c.l.b16 %v247
        %v264 = vunpack.c.l.b16 %v248
        %v265 = vunpack.c.l.b16 %v249
        %v266 = vunpack.c.l.b16 %v250
        %v267 = vunpack.c.l.b16 %v251
        %v268 = vunpack.c.l.b16 %v252
        %v269 = vpack.c.b16 %v262, %v261
        %v270 = vpack.c.b16 %v264, %v263
        %v271 = vpack.c.b16 %v266, %v265
        %v272 = vpack.c.b16 %v268, %v267
        %v278 = vsel %vm222, %v244, 0
        %280 = vmatprep.subr.bf16.mxu0 0
        %281 = vmatpush1.bf16.msra.mxu0 %v269
        %282 = vmatprep.subr.bf16.mxu0 0
        %283 = vmatpush1.bf16.msra.mxu0 %v270
        %284 = vmatprep.subr.bf16.mxu0 0
        %285 = vmatpush1.bf16.msra.mxu0 %v271
        %286 = vmatprep.subr.bf16.mxu0 0
        %287 = vmatpush1.bf16.msra.mxu0 %v272
        %288 = vmatprep.subr.bf16.mxu0 0
        %289 = vmatpush1.bf16.msra.mxu0 0
        %290 = vmatprep.subr.bf16.mxu0 0
        %291 = vmatpush1.bf16.msra.mxu0 0
        %292 = vmatprep.subr.bf16.mxu0 0
        %293 = vmatpush1.bf16.msra.mxu0 0
        %294 = vmatprep.subr.bf16.mxu0 0
        %295 = vmatpush1.bf16.msra.mxu0 0
        %296 = vmatprep.subr.bf16.mxu0 0
        %297 = vmatpush1.bf16.msra.mxu0 0
        %298 = vmatprep.subr.bf16.mxu0 0
        %299 = vmatpush1.bf16.msra.mxu0 0
        %300 = vmatprep.subr.bf16.mxu0 0
        %301 = vmatpush1.bf16.msra.mxu0 0
        %302 = vmatprep.subr.bf16.mxu0 0
        %303 = vmatpush1.bf16.msra.mxu0 0
        %304 = vmatprep.subr.bf16.mxu0 0
        %305 = vmatpush1.bf16.msra.mxu0 0
        %306 = vmatprep.subr.bf16.mxu0 0
        %307 = vmatpush1.bf16.msra.mxu0 0
        %308 = vmatprep.subr.bf16.mxu0 0
        %309 = vmatpush1.bf16.msra.mxu0 0
        %310 = vmatprep.subr.bf16.mxu0 0
        %311 = vmatpush1.bf16.msra.mxu0 0
        %312 = vmatprep.mubr.bf16.mxu0 0
        %313 = vmatmul.mubr.bf16.gmra.mrb[0].mxu0 %v278
        %v314 = vpop.f32.mrb[0].mxu0
        %v315 = vadd.f32 0.0, %v314
        %v316 = vpop.f32.mrb[0].mxu0
        %v317 = vpop.f32.mrb[0].mxu0
        %v318 = vpop.f32.mrb[0].mxu0
        %319 = vdwg.mxu0
        %v320 = vpack.c.bf16 %v315, %v315
        %321 = vst [vmem:[%s218] sm:$0xf] %v320
        %s322 = sand.u32 %s113, 1
        %s323 = scalar_lea.sflag [#allocation4], %s322
        %s324 = sand.u32 %s113, 1
        %s325 = smul.addr %s324, 4
        %s326 = scalar_lea.vmem [#allocation7], %s325
        // Predicated region
        $region41: #{tpu_custom_call.1} parent=31 // pred_check
          %p327 = pneg %p123
        $region42: #{tpu_custom_call.1} parent=31 // pred_check_branch
          %329 = sbr.rel (%p327) target = $region44
        $region43: #{tpu_custom_call.1} parent=31 // pred_region
          %s331 = ssub.s32 64, 64
          %332 = vsyncadd %s323, %s331
          %s333 = smul.addr %s25, 2
          %s334 = sadd.s32 %s26, %s333
          %s335 = smul.addr %s334, 64
          %s336 = scalar_lea.hbm %s3, %s335
          %s338 = sshll.u32 %s326, 4
          %s339 = int_to_ptr.vmem [resolvable:$true] %s338
          %341 = dma.vmem_to_hbm [thread:$0]  %s339, 64, %s336, %s323
        $region44: #{tpu_custom_call.1} parent=31 // pred_fallthru
          _
      $region32: #{tpu_custom_call.1} parent=5 // pred_fallthru
        _
      %p342 = scmp.le.s32.totalorder 2, %s16
      // Predicated region
      $region45: #{tpu_custom_call.1} parent=5 // pred_check
        %p343 = pneg %p342
      $region46: #{tpu_custom_call.1} parent=5 // pred_check_branch
        %345 = sbr.rel (%p343) target = $region48
      $region47: #{tpu_custom_call.1} parent=5 // pred_region
        %s346 = ssub.s32 %s16, 2
        // Predicated region
        $region49: #{tpu_custom_call.1} parent=47 // pred_check
          %p347 = pneg %p129
        $region50: #{tpu_custom_call.1} parent=47 // pred_check_branch
          %349 = sbr.rel (%p347) target = $region52
        $region51: #{tpu_custom_call.1} parent=47 // pred_region
          %s350 = sand.u32 %s114, 1
          %s351 = scalar_lea.sflag [#allocation4], %s350
          %s352 = sand.u32 %s114, 1
          %s353 = smul.addr %s352, 4
          %s354 = scalar_lea.vmem [#allocation7], %s353
          %355 = dma.done %s351, 64
        $region52: #{tpu_custom_call.1} parent=47 // pred_fallthru
          _
      $region48: #{tpu_custom_call.1} parent=5 // pred_fallthru
        _
    $region6: #{tpu_custom_call.1} parent=1 // loop_footer
      %s20 = sadd.s32 1, %s16
    $region7: #{tpu_custom_call.1} parent=1 // loop_footer_branch
      %15 = sbr.rel target = $region3
    $region8: #{tpu_custom_call.1} parent=1 // loop_exit
      _
    %356 = vsyncpa [#allocation3], 1
    %s357 = scalar_lea.sflag [#allocation3], 1
    %358 = vsyncpa %s357, 1
    %359 = vsyncpa [#allocation6], 1
    %360 = vsyncpa [#allocation4], 1
    %s361 = scalar_lea.sflag [#allocation4], 1
    %362 = vsyncpa %s361, 1

</llo_original>
